<compile_context>
chip_gen: v7x
topology: tpu7x:2x2x1
jax: 0.10.0
libtpu: 0.0.40
codegen_flags: <defaults>
</compile_context>

<pallas_src>
import functools

import jax
import jax.numpy as jnp
from jax.experimental import pallas as pl
from jax.experimental.pallas import tpu as pltpu

_LN_EPS = 1e-5  # torch.nn.LayerNorm default


def _conv_ln_kernel(xe_ref, xo_ref, w_ref, g_ref, b_ref, o_ref, *, ho1, cout, eps):
    """One grid step == one image.

    xe_ref/xo_ref: (NRI, 2C)  even / odd A1-rows of the padded image, with the
                   (A2-pair, C) axes merged into 2C lanes and (p, q) flattened
                   into rows (row stride per p-plane == ho1 == Ho+1).
    w_ref:         (6, 2C, Cout_pad)  per-tap weight matrices (resident).
    g_ref/b_ref:   (1, Cout_pad)      f32 LayerNorm affine params (resident).
    o_ref:         (R, Cout_pad)      R = (Wo+1)*(Ho+1) output rows (junk rows
                                      at p==Wo / q==Ho are sliced off outside).
    """
    r = o_ref.shape[0]
    npad = w_ref.shape[-1]

    # 6 taps == contiguous row-offset views of the even/odd slabs:
    #   (kw, kh-pair) -> (slab, row offset)
    taps = ((xe_ref, 0),        # kw=0, kh in {0,1}
            (xe_ref, 1),        # kw=0, kh=2
            (xo_ref, 0),        # kw=1, kh in {0,1}
            (xo_ref, 1),        # kw=1, kh=2
            (xe_ref, ho1),      # kw=2, kh in {0,1}
            (xe_ref, ho1 + 1))  # kw=2, kh=2

    acc = jnp.zeros((r, npad), jnp.float32)
    for i, (ref, s) in enumerate(taps):
        acc += jnp.dot(ref[s:s + r, :], w_ref[i],
                       preferred_element_type=jnp.float32)

    # LayerNorm over the true Cout channels.  Padded lanes of `acc` are exactly
    # zero (zero weight columns), so sum over all lanes == sum over true lanes,
    # and E[x^2] - mean^2 excludes the pad lanes as well.
    inv_c = 1.0 / cout
    mean = jnp.sum(acc, axis=-1, keepdims=True) * inv_c
    var = jnp.maximum(
        jnp.sum(acc * acc, axis=-1, keepdims=True) * inv_c - mean * mean, 0.0)
    inv = jax.lax.rsqrt(var + eps)
    y = (acc - mean) * inv * g_ref[...] + b_ref[...]
    o_ref[...] = y.astype(o_ref.dtype)


@functools.partial(jax.jit, static_argnames=("compute_dtype",))
def conv2_downsampler_pallas(x, w_oihw, gamma, beta, compute_dtype=jnp.bfloat16):
    """
    x:      (B, A1, A2, C)   channels-last activations (what the torch module consumes)
    w_oihw: (2C, C, 3, 3)    nn.Conv2d weight (stride 2, padding 1, no bias)
    gamma, beta: (2C,)       LayerNorm(2C) weight / bias
    returns (B, ceil(A1/2), ceil(A2/2), 2C)  in x.dtype
    """
    B, A1, A2, C = x.shape
    Cout = w_oihw.shape[0]
    Wo = (A1 + 1) // 2
    Ho = (A2 + 1) // 2
    k2 = 2 * C
    npad = ((Cout + 127) // 128) * 128          # lane-dense output width

    # ---- layout plumbing (no transposes, no im2col materialization) --------
    # Pad: +1 left on both spatial axes (conv padding), right-pad A1 generously
    # so the even/odd parity planes below cover every tap in-bounds, right-pad
    # A2 so pairs of columns can be merged into the lane axis.
    xc = x.astype(compute_dtype)
    x_pad = jnp.pad(xc, ((0, 0),
                         (1, 2 * Wo + 5 - A1),   # -> 2*Wo + 6 rows along A1
                         (1, 2 * Ho + 1 - A2),   # -> 2*Ho + 2 rows along A2
                         (0, 0)))
    # Parity split along A1 (stride-2 slice, fused with the pad by XLA), then
    # free row-major reshapes: (Wo+3, 2Ho+2, C) -> ((Wo+3)*(Ho+1), 2C).
    nri = (Wo + 3) * (Ho + 1)
    xe = x_pad[:, 0::2].reshape(B, nri, k2)      # even A1 rows
    xo = x_pad[:, 1::2].reshape(B, nri, k2)      # odd  A1 rows

    # Per-tap weight matrices: index i = kw*2 + j, each (2C, Cout_pad) where the
    # two lane halves carry kh=2j and kh=2j+1 (kh=3 does not exist -> zeros).
    w_khw = jnp.transpose(w_oihw, (2, 3, 1, 0)).astype(jnp.float32)  # (kh,kw,C,Cout)
    zeros_c = jnp.zeros((C, Cout), jnp.float32)
    mats = []
    for kw in range(3):
        for j in range(2):
            top = w_khw[2 * j, kw]
            bot = w_khw[2 * j + 1, kw] if 2 * j + 1 < 3 else zeros_c
            mats.append(jnp.concatenate([top, bot], axis=0))         # (2C, Cout)
    w_mats = jnp.stack(mats, axis=0)                                 # (6, 2C, Cout)
    w_mats = jnp.pad(w_mats, ((0, 0), (0, 0), (0, npad - Cout)))
    w_mats = w_mats.astype(compute_dtype)

    g2d = jnp.pad(gamma.astype(jnp.float32), (0, npad - Cout)).reshape(1, npad)
    b2d = jnp.pad(beta.astype(jnp.float32), (0, npad - Cout)).reshape(1, npad)

    R = (Wo + 1) * (Ho + 1)                      # computed output rows per image
    kernel = functools.partial(_conv_ln_kernel, ho1=Ho + 1, cout=Cout, eps=_LN_EPS)

    cost = pl.CostEstimate(
        flops=2 * B * R * 6 * k2 * npad + 8 * B * R * npad,
        transcendentals=B * R,
        bytes_accessed=(2 * B * nri * k2 * xe.dtype.itemsize
                        + w_mats.size * w_mats.dtype.itemsize
                        + B * R * npad * x.dtype.itemsize),
    )

    out = pl.pallas_call(
        kernel,
        out_shape=jax.ShapeDtypeStruct((B, R, npad), x.dtype),
        grid=(B,),
        in_specs=[
            pl.BlockSpec((None, nri, k2), lambda b: (b, 0, 0)),      # even rows
            pl.BlockSpec((None, nri, k2), lambda b: (b, 0, 0)),      # odd rows
            pl.BlockSpec((6, k2, npad), lambda b: (0, 0, 0)),        # conv weight (resident)
            pl.BlockSpec((1, npad), lambda b: (0, 0)),               # LN gamma (f32)
            pl.BlockSpec((1, npad), lambda b: (0, 0)),               # LN beta  (f32)
        ],
        out_specs=pl.BlockSpec((None, R, npad), lambda b: (b, 0, 0)),
        compiler_params=pltpu.CompilerParams(
            dimension_semantics=("parallel",),
            vmem_limit_bytes=48 * 1024 * 1024,
        ),
        cost_estimate=cost,
    )(xe, xo, w_mats, g2d, b2d)

    # Free reshape, then drop the junk spatial row/col and the lane padding.
    out = out.reshape(B, Wo + 1, Ho + 1, npad)
    return out[:, :Wo, :Ho, :Cout]


def _ref_forward(x, w_oihw, gamma, beta):
    """Pure-JAX reference mirroring the torch forward exactly."""
    xp = jnp.transpose(x, (0, 3, 2, 1))                    # (B, C, A2, A1)
    y = jax.lax.conv_general_dilated(
        xp, w_oihw, window_strides=(2, 2), padding=((1, 1), (1, 1)),
        dimension_numbers=("NCHW", "OIHW", "NCHW"),
        precision=jax.lax.Precision.HIGHEST)
    y = jnp.transpose(y, (0, 3, 2, 1))                     # (B, Wo, Ho, 2C)
    mean = jnp.mean(y, axis=-1, keepdims=True)
    var = jnp.mean((y - mean) ** 2, axis=-1, keepdims=True)
    return (y - mean) / jnp.sqrt(var + _LN_EPS) * gamma + beta


if __name__ == "__main__":
    # Small shapes consistent with the module: channels-last feature map, dim=4.
    B, A1, A2, dim = 2, 16, 16, 4

    key = jax.random.PRNGKey(0)
    k_x, k_w, k_g, k_b = jax.random.split(key, 4)
    x = jax.random.normal(k_x, (B, A1, A2, dim), dtype=jnp.float32)
    w = jax.random.normal(k_w, (2 * dim, dim, 3, 3), jnp.float32) * 0.1
    gamma = 1.0 + 0.05 * jax.random.normal(k_g, (2 * dim,), jnp.float32)
    beta = 0.05 * jax.random.normal(k_b, (2 * dim,), jnp.float32)

    out = conv2_downsampler_pallas(x, w, gamma, beta)      # bf16-fed perf path
    out = jax.block_until_ready(out)
    assert out.shape == (B, (A1 + 1) // 2, (A2 + 1) // 2, 2 * dim), out.shape

    # Tight check: same bf16-quantized operands, full-precision reference math.
    xq = x.astype(jnp.bfloat16).astype(jnp.float32)
    wq = w.astype(jnp.bfloat16).astype(jnp.float32)
    ref_matched = _ref_forward(xq, wq, gamma, beta)
    assert jnp.allclose(out, ref_matched, atol=1e-3, rtol=1e-3), \
        "mismatch vs bf16-matched reference"

    # Sanity check vs the full f32 reference (bf16 feed => loose tolerance).
    ref_full = _ref_forward(x, w, gamma, beta)
    assert jnp.allclose(out, ref_full, atol=1.5e-1, rtol=1.5e-1), \
        "mismatch vs full-precision reference"

    print("KERNEL_OK")
</pallas_src>

<mosaic_0001>
module attributes {stable_mosaic.version = 11 : i64} {
  func.func @_conv_ln_kernel(%arg0: i32, %arg1: memref<1x99x8xbf16, #tpu.memory_space<vmem>>, %arg2: memref<1x99x8xbf16, #tpu.memory_space<vmem>>, %arg3: memref<6x8x128xbf16, #tpu.memory_space<vmem>>, %arg4: memref<1x128xf32, #tpu.memory_space<vmem>>, %arg5: memref<1x128xf32, #tpu.memory_space<vmem>>, %arg6: memref<1x81x128xf32, #tpu.memory_space<vmem>>) attributes {dimension_semantics = [#tpu.dimension_semantics<parallel>], iteration_bounds = array<i64: 2>, scalar_prefetch = 0 : i64, scratch_operands = 0 : i64, tpu.core_type = #tpu.core_type<tc>, window_params = [{transform_indices = @transform_0, window_bounds = array<i64: 1, 99, 8>}, {transform_indices = @transform_1, window_bounds = array<i64: 1, 99, 8>}, {pipeline_mode = #tpu.pipeline_mode<synchronous>, transform_indices = @transform_2, window_bounds = array<i64: 6, 8, 128>}, {pipeline_mode = #tpu.pipeline_mode<synchronous>, transform_indices = @transform_3, window_bounds = array<i64: 1, 128>}, {pipeline_mode = #tpu.pipeline_mode<synchronous>, transform_indices = @transform_4, window_bounds = array<i64: 1, 128>}, {transform_indices = @transform_5, window_bounds = array<i64: 1, 81, 128>}]} {
    %cst = arith.constant 0.000000e+00 : f32
    %0 = vector.broadcast %cst : f32 to vector<81x128xf32>
    %c0 = arith.constant 0 : index
    %c0_0 = arith.constant 0 : index
    %c0_1 = arith.constant 0 : index
    %1 = vector.load %arg1[%c0, %c0_0, %c0_1] : memref<1x99x8xbf16, #tpu.memory_space<vmem>>, vector<1x81x8xbf16>
    %2 = vector.shape_cast %1 : vector<1x81x8xbf16> to vector<81x8xbf16>
    %c0_2 = arith.constant 0 : index
    %c0_3 = arith.constant 0 : index
    %c0_4 = arith.constant 0 : index
    %3 = vector.load %arg3[%c0_2, %c0_3, %c0_4] : memref<6x8x128xbf16, #tpu.memory_space<vmem>>, vector<1x8x128xbf16>
    %4 = vector.shape_cast %3 : vector<1x8x128xbf16> to vector<8x128xbf16>
    %cst_5 = arith.constant dense<0.000000e+00> : vector<81x128xf32>
    %5 = tpu.matmul %2, %4, %cst_5 {dimension_numbers = #tpu.dot_dimension_numbers<[1], [0], [0], [1], [0, 0, 1, 1], [], []>} : vector<81x8xbf16>, vector<8x128xbf16>, vector<81x128xf32> -> vector<81x128xf32>
    %6 = arith.addf %0, %5 : vector<81x128xf32>
    %c0_6 = arith.constant 0 : index
    %c1 = arith.constant 1 : index
    %c0_7 = arith.constant 0 : index
    %7 = vector.load %arg1[%c0_6, %c1, %c0_7] : memref<1x99x8xbf16, #tpu.memory_space<vmem>>, vector<1x81x8xbf16>
    %8 = vector.shape_cast %7 : vector<1x81x8xbf16> to vector<81x8xbf16>
    %c1_8 = arith.constant 1 : index
    %c0_9 = arith.constant 0 : index
    %c0_10 = arith.constant 0 : index
    %9 = vector.load %arg3[%c1_8, %c0_9, %c0_10] : memref<6x8x128xbf16, #tpu.memory_space<vmem>>, vector<1x8x128xbf16>
    %10 = vector.shape_cast %9 : vector<1x8x128xbf16> to vector<8x128xbf16>
    %cst_11 = arith.constant dense<0.000000e+00> : vector<81x128xf32>
    %11 = tpu.matmul %8, %10, %cst_11 {dimension_numbers = #tpu.dot_dimension_numbers<[1], [0], [0], [1], [0, 0, 1, 1], [], []>} : vector<81x8xbf16>, vector<8x128xbf16>, vector<81x128xf32> -> vector<81x128xf32>
    %12 = arith.addf %6, %11 : vector<81x128xf32>
    %c0_12 = arith.constant 0 : index
    %c0_13 = arith.constant 0 : index
    %c0_14 = arith.constant 0 : index
    %13 = vector.load %arg2[%c0_12, %c0_13, %c0_14] : memref<1x99x8xbf16, #tpu.memory_space<vmem>>, vector<1x81x8xbf16>
    %14 = vector.shape_cast %13 : vector<1x81x8xbf16> to vector<81x8xbf16>
    %c2 = arith.constant 2 : index
    %c0_15 = arith.constant 0 : index
    %c0_16 = arith.constant 0 : index
    %15 = vector.load %arg3[%c2, %c0_15, %c0_16] : memref<6x8x128xbf16, #tpu.memory_space<vmem>>, vector<1x8x128xbf16>
    %16 = vector.shape_cast %15 : vector<1x8x128xbf16> to vector<8x128xbf16>
    %cst_17 = arith.constant dense<0.000000e+00> : vector<81x128xf32>
    %17 = tpu.matmul %14, %16, %cst_17 {dimension_numbers = #tpu.dot_dimension_numbers<[1], [0], [0], [1], [0, 0, 1, 1], [], []>} : vector<81x8xbf16>, vector<8x128xbf16>, vector<81x128xf32> -> vector<81x128xf32>
    %18 = arith.addf %12, %17 : vector<81x128xf32>
    %c0_18 = arith.constant 0 : index
    %c1_19 = arith.constant 1 : index
    %c0_20 = arith.constant 0 : index
    %19 = vector.load %arg2[%c0_18, %c1_19, %c0_20] : memref<1x99x8xbf16, #tpu.memory_space<vmem>>, vector<1x81x8xbf16>
    %20 = vector.shape_cast %19 : vector<1x81x8xbf16> to vector<81x8xbf16>
    %c3 = arith.constant 3 : index
    %c0_21 = arith.constant 0 : index
    %c0_22 = arith.constant 0 : index
    %21 = vector.load %arg3[%c3, %c0_21, %c0_22] : memref<6x8x128xbf16, #tpu.memory_space<vmem>>, vector<1x8x128xbf16>
    %22 = vector.shape_cast %21 : vector<1x8x128xbf16> to vector<8x128xbf16>
    %cst_23 = arith.constant dense<0.000000e+00> : vector<81x128xf32>
    %23 = tpu.matmul %20, %22, %cst_23 {dimension_numbers = #tpu.dot_dimension_numbers<[1], [0], [0], [1], [0, 0, 1, 1], [], []>} : vector<81x8xbf16>, vector<8x128xbf16>, vector<81x128xf32> -> vector<81x128xf32>
    %24 = arith.addf %18, %23 : vector<81x128xf32>
    %c0_24 = arith.constant 0 : index
    %c9 = arith.constant 9 : index
    %c0_25 = arith.constant 0 : index
    %25 = vector.load %arg1[%c0_24, %c9, %c0_25] : memref<1x99x8xbf16, #tpu.memory_space<vmem>>, vector<1x81x8xbf16>
    %26 = vector.shape_cast %25 : vector<1x81x8xbf16> to vector<81x8xbf16>
    %c4 = arith.constant 4 : index
    %c0_26 = arith.constant 0 : index
    %c0_27 = arith.constant 0 : index
    %27 = vector.load %arg3[%c4, %c0_26, %c0_27] : memref<6x8x128xbf16, #tpu.memory_space<vmem>>, vector<1x8x128xbf16>
    %28 = vector.shape_cast %27 : vector<1x8x128xbf16> to vector<8x128xbf16>
    %cst_28 = arith.constant dense<0.000000e+00> : vector<81x128xf32>
    %29 = tpu.matmul %26, %28, %cst_28 {dimension_numbers = #tpu.dot_dimension_numbers<[1], [0], [0], [1], [0, 0, 1, 1], [], []>} : vector<81x8xbf16>, vector<8x128xbf16>, vector<81x128xf32> -> vector<81x128xf32>
    %30 = arith.addf %24, %29 : vector<81x128xf32>
    %c0_29 = arith.constant 0 : index
    %c10 = arith.constant 10 : index
    %c0_30 = arith.constant 0 : index
    %31 = vector.load %arg1[%c0_29, %c10, %c0_30] : memref<1x99x8xbf16, #tpu.memory_space<vmem>>, vector<1x81x8xbf16>
    %32 = vector.shape_cast %31 : vector<1x81x8xbf16> to vector<81x8xbf16>
    %c5 = arith.constant 5 : index
    %c0_31 = arith.constant 0 : index
    %c0_32 = arith.constant 0 : index
    %33 = vector.load %arg3[%c5, %c0_31, %c0_32] : memref<6x8x128xbf16, #tpu.memory_space<vmem>>, vector<1x8x128xbf16>
    %34 = vector.shape_cast %33 : vector<1x8x128xbf16> to vector<8x128xbf16>
    %cst_33 = arith.constant dense<0.000000e+00> : vector<81x128xf32>
    %35 = tpu.matmul %32, %34, %cst_33 {dimension_numbers = #tpu.dot_dimension_numbers<[1], [0], [0], [1], [0, 0, 1, 1], [], []>} : vector<81x8xbf16>, vector<8x128xbf16>, vector<81x128xf32> -> vector<81x128xf32>
    %36 = arith.addf %30, %35 : vector<81x128xf32>
    %cst_34 = arith.constant dense<0.000000e+00> : vector<81xf32>
    %37 = vector.multi_reduction <add>, %36, %cst_34 [1] : vector<81x128xf32> to vector<81xf32>
    %38 = vector.shape_cast %37 : vector<81xf32> to vector<81x1xf32>
    %cst_35 = arith.constant 1.250000e-01 : f32
    %39 = vector.broadcast %cst_35 : f32 to vector<81x1xf32>
    %40 = arith.mulf %38, %39 : vector<81x1xf32>
    %41 = arith.mulf %36, %36 : vector<81x128xf32>
    %cst_36 = arith.constant dense<0.000000e+00> : vector<81xf32>
    %42 = vector.multi_reduction <add>, %41, %cst_36 [1] : vector<81x128xf32> to vector<81xf32>
    %43 = vector.shape_cast %42 : vector<81xf32> to vector<81x1xf32>
    %cst_37 = arith.constant 1.250000e-01 : f32
    %44 = vector.broadcast %cst_37 : f32 to vector<81x1xf32>
    %45 = arith.mulf %43, %44 : vector<81x1xf32>
    %46 = arith.mulf %40, %40 : vector<81x1xf32>
    %47 = arith.subf %45, %46 : vector<81x1xf32>
    %cst_38 = arith.constant 0.000000e+00 : f32
    %48 = vector.broadcast %cst_38 : f32 to vector<81x1xf32>
    %49 = arith.maximumf %47, %48 : vector<81x1xf32>
    %cst_39 = arith.constant 9.99999974E-6 : f32
    %50 = vector.broadcast %cst_39 : f32 to vector<81x1xf32>
    %51 = arith.addf %49, %50 : vector<81x1xf32>
    %52 = math.rsqrt %51 : vector<81x1xf32>
    %53 = vector.broadcast %40 : vector<81x1xf32> to vector<81x128xf32>
    %54 = arith.subf %36, %53 : vector<81x128xf32>
    %55 = vector.broadcast %52 : vector<81x1xf32> to vector<81x128xf32>
    %56 = arith.mulf %54, %55 : vector<81x128xf32>
    %c0_40 = arith.constant 0 : index
    %c0_41 = arith.constant 0 : index
    %57 = vector.load %arg4[%c0_40, %c0_41] : memref<1x128xf32, #tpu.memory_space<vmem>>, vector<1x128xf32>
    %58 = vector.broadcast %57 : vector<1x128xf32> to vector<81x128xf32>
    %59 = arith.mulf %56, %58 : vector<81x128xf32>
    %c0_42 = arith.constant 0 : index
    %c0_43 = arith.constant 0 : index
    %60 = vector.load %arg5[%c0_42, %c0_43] : memref<1x128xf32, #tpu.memory_space<vmem>>, vector<1x128xf32>
    %61 = vector.broadcast %60 : vector<1x128xf32> to vector<81x128xf32>
    %62 = arith.addf %59, %61 : vector<81x128xf32>
    %c0_44 = arith.constant 0 : index
    %c0_45 = arith.constant 0 : index
    %c0_46 = arith.constant 0 : index
    %63 = vector.load %arg6[%c0_44, %c0_45, %c0_46] : memref<1x81x128xf32, #tpu.memory_space<vmem>>, vector<1x81x128xf32>
    %64 = vector.shape_cast %63 : vector<1x81x128xf32> to vector<81x128xf32>
    %65 = vector.shape_cast %62 : vector<81x128xf32> to vector<1x81x128xf32>
    tpu.vector_store %arg6[%c0_44, %c0_45, %c0_46], %65 {strides = array<i32>} : memref<1x81x128xf32, #tpu.memory_space<vmem>>, vector<1x81x128xf32>,
    return
  }
  func.func @transform_0(%arg0: i32) -> (i32, i32, i32) {
    %c0_i32 = arith.constant 0 : i32
    %c0_i32_0 = arith.constant 0 : i32
    %c0_i32_1 = arith.constant 0 : i32
    return %arg0, %c0_i32, %c0_i32_0 : i32, i32, i32
  }
  func.func @transform_1(%arg0: i32) -> (i32, i32, i32) {
    %c0_i32 = arith.constant 0 : i32
    %c0_i32_0 = arith.constant 0 : i32
    %c0_i32_1 = arith.constant 0 : i32
    return %arg0, %c0_i32, %c0_i32_0 : i32, i32, i32
  }
  func.func @transform_2(%arg0: i32) -> (i32, i32, i32) {
    %c0_i32 = arith.constant 0 : i32
    %c0_i32_0 = arith.constant 0 : i32
    %c0_i32_1 = arith.constant 0 : i32
    %c0_i32_2 = arith.constant 0 : i32
    return %c0_i32, %c0_i32_0, %c0_i32_1 : i32, i32, i32
  }
  func.func @transform_3(%arg0: i32) -> (i32, i32) {
    %c0_i32 = arith.constant 0 : i32
    %c0_i32_0 = arith.constant 0 : i32
    %c0_i32_1 = arith.constant 0 : i32
    return %c0_i32, %c0_i32_0 : i32, i32
  }
  func.func @transform_4(%arg0: i32) -> (i32, i32) {
    %c0_i32 = arith.constant 0 : i32
    %c0_i32_0 = arith.constant 0 : i32
    %c0_i32_1 = arith.constant 0 : i32
    return %c0_i32, %c0_i32_0 : i32, i32
  }
  func.func @transform_5(%arg0: i32) -> (i32, i32, i32) {
    %c0_i32 = arith.constant 0 : i32
    %c0_i32_0 = arith.constant 0 : i32
    %c0_i32_1 = arith.constant 0 : i32
    return %arg0, %c0_i32, %c0_i32_0 : i32, i32, i32
  }
}

</mosaic_0001>

<llo_original>
// kernel: conv2_downsampler_pallas.1
$region0: #{conv2_downsampler_pallas.1}
  #allocation0 [shape = 'u32[]', space=smem, size = 0x4, offset = 0x4, fixed_abs, tag = 'smem constant byte address 0x4 - core index']
  #allocation1 [shape = 'u32[144,128]{1,0:T(1,128)}', space=vmem, size = 0x12000, scoped, tag = 'internal scratch']
  %s0 = inlined_call_operand.vmem [shape: bf16[2,99,8], index: 0, kind: input, shape index: {}]
  %s1 = inlined_call_operand.vmem [shape: bf16[2,99,8], index: 1, kind: input, shape index: {}]
  %s2 = inlined_call_operand.vmem [shape: bf16[6,8,128], index: 2, kind: input, shape index: {}]
  %s3 = inlined_call_operand.vmem [shape: f32[1,128], index: 3, kind: input, shape index: {}]
  %s4 = inlined_call_operand.vmem [shape: f32[1,128], index: 4, kind: input, shape index: {}]
  %s5 = inlined_call_operand.vmem [shape: f32[2,81,128], index: 5, kind: output, shape index: {}]
  %s6 = sld [smem:[#allocation0]]
  $region53: #{conv2_downsampler_pallas.1} parent=0
    _
  %s8 = ssub.s32 1, %s6
  %s9 = scalar_select 0, %s8, %s6
  loop: start=0, step=1, limit=4
  $region2: #{conv2_downsampler_pallas.1} parent=0 // loop_pre_header
    _
  $region3: #{conv2_downsampler_pallas.1} parent=0 // loop_header
    %s11 = sphi 0, %s15
    %p12 = scmp.ge.s32.totalorder %s11, 4
    %s21 = sphi 0, %s23
    %s24 = sphi 0, %s21
    %s25 = sphi 0, %s24
    %s41 = sphi 0, %s25
    %s47 = sphi 0, %s49
    %s50 = sphi 0, %s47
    %s51 = sphi 0, %s50
    %s67 = sphi 0, %s51
    %s71 = sphi 0, %s71
    %s73 = sphi 0, %s71
    %s74 = sphi 0, %s73
    %s88 = sphi 0, %s74
    %s92 = sphi 0, %s92
    %s94 = sphi 0, %s92
    %s95 = sphi 0, %s94
    %s109 = sphi 0, %s95
    %s113 = sphi 0, %s113
    %s115 = sphi 0, %s113
    %s116 = sphi 0, %s115
    %s130 = sphi 0, %s116
    %s136 = sphi 0, %s138
    %s139 = sphi 0, %s136
    %s140 = sphi 0, %s139
    %s156 = sphi 0, %s140
  $region4: #{conv2_downsampler_pallas.1} parent=0 // loop_header_branch
    %14 = sbr.rel (%p12) target = $region8
  $region5: #{conv2_downsampler_pallas.1} parent=0 // loop_body
    %s16 = ssub.s32 %s11, 1
    %s17 = ssub.s32 %s11, 2
    %s18 = sadd.s32 %s11, 1
    %s19 = ssub.s32 %s11, %s18
    %p20 = scmp.eq.s32.totalorder %s19, 0
    %s22 = sadd.s32 %s21, 1
    %s23 = scalar_select %p20, %s21, %s22
    %p26 = pneg %p20
    %p27 = scmp.eq.s32.totalorder %s11, 1
    %p28 = por %p26, %p27
    %p29 = scmp.ne.s32.totalorder %s21, %s24
    %p30 = scmp.eq.s32.totalorder %s11, 0
    %p31 = por %p29, %p30
    %p32 = scmp.ne.s32.totalorder %s21, %s24
    %p33 = scmp.eq.s32.totalorder %s16, 1
    %p34 = por %p32, %p33
    %p35 = scmp.ne.s32.totalorder %s24, %s25
    %p36 = scmp.eq.s32.totalorder %s16, 0
    %p37 = por %p35, %p36
    %p38 = scmp.ne.s32.totalorder %s24, %s25
    %p39 = scmp.eq.s32.totalorder %s17, 1
    %p40 = por %p38, %p39
    %p42 = scmp.ne.s32.totalorder %s25, %s41
    %p43 = scmp.eq.s32.totalorder %s17, 0
    %p44 = por %p42, %p43
    %s45 = ssub.s32 %s11, %s18
    %p46 = scmp.eq.s32.totalorder %s45, 0
    %s48 = sadd.s32 %s47, 1
    %s49 = scalar_select %p46, %s47, %s48
    %p52 = pneg %p46
    %p53 = scmp.eq.s32.totalorder %s11, 1
    %p54 = por %p52, %p53
    %p55 = scmp.ne.s32.totalorder %s47, %s50
    %p56 = scmp.eq.s32.totalorder %s11, 0
    %p57 = por %p55, %p56
    %p58 = scmp.ne.s32.totalorder %s47, %s50
    %p59 = scmp.eq.s32.totalorder %s16, 1
    %p60 = por %p58, %p59
    %p61 = scmp.ne.s32.totalorder %s50, %s51
    %p62 = scmp.eq.s32.totalorder %s16, 0
    %p63 = por %p61, %p62
    %p64 = scmp.ne.s32.totalorder %s50, %s51
    %p65 = scmp.eq.s32.totalorder %s17, 1
    %p66 = por %p64, %p65
    %p68 = scmp.ne.s32.totalorder %s51, %s67
    %p69 = scmp.eq.s32.totalorder %s17, 0
    %p70 = por %p68, %p69
    %s72 = sadd.s32 %s71, 1
    %p75 = scmp.eq.s32.totalorder %s11, 1
    %p76 = scmp.ne.s32.totalorder %s71, %s73
    %p77 = scmp.eq.s32.totalorder %s11, 0
    %p78 = por %p76, %p77
    %p79 = scmp.ne.s32.totalorder %s71, %s73
    %p80 = scmp.eq.s32.totalorder %s16, 1
    %p81 = por %p79, %p80
    %p82 = scmp.ne.s32.totalorder %s73, %s74
    %p83 = scmp.eq.s32.totalorder %s16, 0
    %p84 = por %p82, %p83
    %p85 = scmp.ne.s32.totalorder %s73, %s74
    %p86 = scmp.eq.s32.totalorder %s17, 1
    %p87 = por %p85, %p86
    %p89 = scmp.ne.s32.totalorder %s74, %s88
    %p90 = scmp.eq.s32.totalorder %s17, 0
    %p91 = por %p89, %p90
    %s93 = sadd.s32 %s92, 1
    %p96 = scmp.eq.s32.totalorder %s11, 1
    %p97 = scmp.ne.s32.totalorder %s92, %s94
    %p98 = scmp.eq.s32.totalorder %s11, 0
    %p99 = por %p97, %p98
    %p100 = scmp.ne.s32.totalorder %s92, %s94
    %p101 = scmp.eq.s32.totalorder %s16, 1
    %p102 = por %p100, %p101
    %p103 = scmp.ne.s32.totalorder %s94, %s95
    %p104 = scmp.eq.s32.totalorder %s16, 0
    %p105 = por %p103, %p104
    %p106 = scmp.ne.s32.totalorder %s94, %s95
    %p107 = scmp.eq.s32.totalorder %s17, 1
    %p108 = por %p106, %p107
    %p110 = scmp.ne.s32.totalorder %s95, %s109
    %p111 = scmp.eq.s32.totalorder %s17, 0
    %p112 = por %p110, %p111
    %s114 = sadd.s32 %s113, 1
    %p117 = scmp.eq.s32.totalorder %s11, 1
    %p118 = scmp.ne.s32.totalorder %s113, %s115
    %p119 = scmp.eq.s32.totalorder %s11, 0
    %p120 = por %p118, %p119
    %p121 = scmp.ne.s32.totalorder %s113, %s115
    %p122 = scmp.eq.s32.totalorder %s16, 1
    %p123 = por %p121, %p122
    %p124 = scmp.ne.s32.totalorder %s115, %s116
    %p125 = scmp.eq.s32.totalorder %s16, 0
    %p126 = por %p124, %p125
    %p127 = scmp.ne.s32.totalorder %s115, %s116
    %p128 = scmp.eq.s32.totalorder %s17, 1
    %p129 = por %p127, %p128
    %p131 = scmp.ne.s32.totalorder %s116, %s130
    %p132 = scmp.eq.s32.totalorder %s17, 0
    %p133 = por %p131, %p132
    %s134 = ssub.s32 %s11, %s18
    %p135 = scmp.eq.s32.totalorder %s134, 0
    %s137 = sadd.s32 %s136, 1
    %s138 = scalar_select %p135, %s136, %s137
    %p141 = pneg %p135
    %p142 = scmp.eq.s32.totalorder %s11, 1
    %p143 = por %p141, %p142
    %p144 = scmp.ne.s32.totalorder %s136, %s139
    %p145 = scmp.eq.s32.totalorder %s11, 0
    %p146 = por %p144, %p145
    %p147 = scmp.ne.s32.totalorder %s136, %s139
    %p148 = scmp.eq.s32.totalorder %s16, 1
    %p149 = por %p147, %p148
    %p150 = scmp.ne.s32.totalorder %s139, %s140
    %p151 = scmp.eq.s32.totalorder %s16, 0
    %p152 = por %p150, %p151
    %p153 = scmp.ne.s32.totalorder %s139, %s140
    %p154 = scmp.eq.s32.totalorder %s17, 1
    %p155 = por %p153, %p154
    %p157 = scmp.ne.s32.totalorder %s140, %s156
    %p158 = scmp.eq.s32.totalorder %s17, 0
    %p159 = por %p157, %p158
    %p160 = scmp.le.s32.totalorder 1, %s11
    %p161 = scmp.lt.s32.totalorder %s11, 3
    %p162 = pnand %p160, %p161
    %p163 = pneg %p162
    // Predicated region
    $region9: #{conv2_downsampler_pallas.1} parent=5 // pred_check
      _
    $region10: #{conv2_downsampler_pallas.1} parent=5 // pred_check_branch
      %165 = sbr.rel (%p162) target = $region12
    $region11: #{conv2_downsampler_pallas.1} parent=5 // pred_region
      %s166 = ssub.s32 %s11, 1
      // Predicated region
      $region13: #{conv2_downsampler_pallas.1} parent=11 // pred_check
        %p167 = pneg %p84
      $region14: #{conv2_downsampler_pallas.1} parent=11 // pred_check_branch
        %169 = sbr.rel (%p167) target = $region16
      $region15: #{conv2_downsampler_pallas.1} parent=11 // pred_region
        _
      $region16: #{conv2_downsampler_pallas.1} parent=11 // pred_fallthru
        _
      // Predicated region
      $region17: #{conv2_downsampler_pallas.1} parent=11 // pred_check
        %p170 = pneg %p105
      $region18: #{conv2_downsampler_pallas.1} parent=11 // pred_check_branch
        %172 = sbr.rel (%p170) target = $region20
      $region19: #{conv2_downsampler_pallas.1} parent=11 // pred_region
        _
      $region20: #{conv2_downsampler_pallas.1} parent=11 // pred_fallthru
        _
      // Predicated region
      $region21: #{conv2_downsampler_pallas.1} parent=11 // pred_check
        %p173 = pneg %p126
      $region22: #{conv2_downsampler_pallas.1} parent=11 // pred_check_branch
        %175 = sbr.rel (%p173) target = $region24
      $region23: #{conv2_downsampler_pallas.1} parent=11 // pred_region
        _
      $region24: #{conv2_downsampler_pallas.1} parent=11 // pred_fallthru
        _
    $region12: #{conv2_downsampler_pallas.1} parent=5 // pred_fallthru
      _
    %p176 = scmp.lt.s32.totalorder %s11, 2
    // Predicated region
    $region25: #{conv2_downsampler_pallas.1} parent=5 // pred_check
      %p177 = pneg %p176
    $region26: #{conv2_downsampler_pallas.1} parent=5 // pred_check_branch
      %179 = sbr.rel (%p177) target = $region28
    $region27: #{conv2_downsampler_pallas.1} parent=5 // pred_region
      // Predicated region
      $region29: #{conv2_downsampler_pallas.1} parent=27 // pred_check
        %p180 = pneg %p31
      $region30: #{conv2_downsampler_pallas.1} parent=27 // pred_check_branch
        %182 = sbr.rel (%p180) target = $region32
      $region31: #{conv2_downsampler_pallas.1} parent=27 // pred_region
        %p183 = scmp.lt.s32.totalorder %s11, 1
        %s184 = scalar_select %p183, %s11, 1
        %s185 = smul.addr %s184, 13
        %s186 = smul.addr %s185, 4
        %s187 = scalar_lea.vmem %s0, %s186
      $region32: #{conv2_downsampler_pallas.1} parent=27 // pred_fallthru
        _
      // Predicated region
      $region33: #{conv2_downsampler_pallas.1} parent=27 // pred_check
        %p188 = pneg %p57
      $region34: #{conv2_downsampler_pallas.1} parent=27 // pred_check_branch
        %190 = sbr.rel (%p188) target = $region36
      $region35: #{conv2_downsampler_pallas.1} parent=27 // pred_region
        %p191 = scmp.lt.s32.totalorder %s11, 1
        %s192 = scalar_select %p191, %s11, 1
        %s193 = smul.addr %s192, 13
        %s194 = smul.addr %s193, 4
        %s195 = scalar_lea.vmem %s1, %s194
      $region36: #{conv2_downsampler_pallas.1} parent=27 // pred_fallthru
        _
    $region28: #{conv2_downsampler_pallas.1} parent=5 // pred_fallthru
      _
    %p196 = scmp.le.s32.totalorder 1, %s11
    %p197 = scmp.lt.s32.totalorder %s11, 3
    %p198 = pnand %p196, %p197
    %p199 = pneg %p198
    // Predicated region
    $region37: #{conv2_downsampler_pallas.1} parent=5 // pred_check
      _
    $region38: #{conv2_downsampler_pallas.1} parent=5 // pred_check_branch
      %201 = sbr.rel (%p198) target = $region40
    $region39: #{conv2_downsampler_pallas.1} parent=5 // pred_region
      %s202 = ssub.s32 %s11, 1
      %p203 = scmp.lt.s32.totalorder %s16, 1
      %s204 = scalar_select %p203, %s16, 1
      %s205 = smul.addr %s204, 13
      %s206 = smul.addr %s205, 4
      %s207 = scalar_lea.vmem %s0, %s206
      %p208 = pneg %p37
      %p209 = pneg %p34
      %p210 = scmp.lt.s32.totalorder %s16, 1
      %s211 = scalar_select %p210, %s16, 1
      %s212 = smul.addr %s211, 13
      %s213 = smul.addr %s212, 4
      %s214 = scalar_lea.vmem %s1, %s213
      %p215 = pneg %p63
      %p216 = pneg %p60
      %p217 = pneg %p84
      %p218 = pneg %p81
      %p219 = pneg %p105
      %p220 = pneg %p102
      %p221 = pneg %p126
      %p222 = pneg %p123
      %p223 = pneg %p152
      %p224 = pneg %p149
      %p225 = scmp.lt.s32.totalorder %s16, 1
      %s226 = scalar_select %p225, %s16, 1
      %s227 = smul.addr %s226, 11
      %s228 = smul.addr %s227, 8
      %s229 = scalar_lea.vmem %s5, %s228
      %p230 = scmp.lt.s32.totalorder %s16, 1
      %s231 = scalar_select %p230, %s16, 1
      %s232 = smul.addr %s231, 13
      %s233 = smul.addr %s232, 4
      %s234 = scalar_lea.vmem %s0, %s233
      %p235 = scmp.lt.s32.totalorder %s16, 1
      %s236 = scalar_select %p235, %s16, 1
      %s237 = smul.addr %s236, 13
      %s238 = smul.addr %s237, 4
      %s239 = scalar_lea.vmem %s1, %s238
      %p240 = scmp.lt.s32.totalorder %s16, 1
      %s241 = scalar_select %p240, %s16, 1
      %s242 = smul.addr %s241, 11
      %s243 = smul.addr %s242, 8
      %s244 = scalar_lea.vmem %s5, %s243
      %v246 = vld [vmem:[%s234] sm:$0xf]
      %v247 = vld [vmem:[%s234 + $0x4] sm:$0xf]
      %v248 = vld [vmem:[%s234 + $0x8] sm:$0xf]
      %v249 = vld [vmem:[%s234 + $0xc] sm:$0xf]
      %v250 = vld [vmem:[%s234 + $0x10] sm:$0xf]
      %v251 = vld [vmem:[%s234 + $0x14] sm:$0xf]
      %v252 = vld [vmem:[%s234 + $0x18] sm:$0xf]
      %v253 = vld [vmem:[%s234 + $0x1c] sm:$0xf]
      %v254 = vld [vmem:[%s234 + $0x20] sm:$0xf]
      %v255 = vld [vmem:[%s234 + $0x24] sm:$0xf]
      %v256 = vld [vmem:[%s234 + $0x28] sm:$0x1]
      %v257 = vld [vmem:[%s2] sm:$0xf]
      %s258 = scalar_lea.vmem %s2, 4
      %v259 = vld [vmem:[%s258] sm:$0xf]
      %v271 = vunpack.c.l.b16 %v246
      %v272 = vunpack.c.l.b16 %v247
      %v273 = vunpack.c.l.b16 %v248
      %v274 = vunpack.c.l.b16 %v249
      %v275 = vunpack.c.l.b16 %v250
      %v276 = vunpack.c.l.b16 %v251
      %v277 = vunpack.c.l.b16 %v252
      %v278 = vunpack.c.l.b16 %v253
      %v279 = vunpack.c.l.b16 %v254
      %v280 = vunpack.c.l.b16 %v255
      %v281 = vunpack.c.l.b16 %v256
      %v282 = vpack.c.b16 %v272, %v271
      %v283 = vpack.c.b16 %v274, %v273
      %v284 = vpack.c.b16 %v276, %v275
      %v285 = vpack.c.b16 %v278, %v277
      %v286 = vpack.c.b16 %v280, %v279
      %v287 = vpack.c.b16 %v281, %v281
      %vm288 = vsmask.f32 7424
      %v290 = vshrl.u32 %v282, 16
      %v292 = vshll.u32 %v282, 16
      %v294 = vrot.slane %v292, 1
      %v295 = vor.u32 %v290, %v294
      %v297 = vshll.u32 %v283, 16
      %v299 = vrot.slane %v297, 1
      %v300 = vsel %vm288, %v295, %v299
      %v301 = vshrl.u32 %v283, 16
      %v303 = vor.u32 %v301, %v299
      %v305 = vshll.u32 %v284, 16
      %v307 = vrot.slane %v305, 1
      %v308 = vsel %vm288, %v303, %v307
      %v309 = vshrl.u32 %v284, 16
      %v311 = vor.u32 %v309, %v307
      %v313 = vshll.u32 %v285, 16
      %v315 = vrot.slane %v313, 1
      %v316 = vsel %vm288, %v311, %v315
      %v317 = vshrl.u32 %v285, 16
      %v319 = vor.u32 %v317, %v315
      %v321 = vshll.u32 %v286, 16
      %v323 = vrot.slane %v321, 1
      %v324 = vsel %vm288, %v319, %v323
      %v325 = vshrl.u32 %v286, 16
      %v327 = vor.u32 %v325, %v323
      %v329 = vshll.u32 %v287, 16
      %v331 = vrot.slane %v329, 1
      %v332 = vsel %vm288, %v327, %v331
      %v333 = vshrl.u32 %v287, 16
      %vm335 = vcmask 64512
      %v337 = vsel %vm335, %v300, 0
      %v340 = vsel %vm335, %v308, 0
      %v343 = vsel %vm335, %v316, 0
      %v346 = vsel %vm335, %v324, 0
      %v349 = vsel %vm335, %v332, 0
      %v352 = vsel %vm335, %v333, 0
      %vm354 = vcmask 1043456
      %v356 = vsel %vm354, %v259, 0
      %358 = vmatprep.subr.bf16.mxu0 0
      %359 = vmatpush1.bf16.msra.mxu0 %v356
      %360 = vmatprep.subr.bf16.mxu0 0
      %361 = vmatpush1.bf16.msra.mxu0 0
      %362 = vmatprep.subr.bf16.mxu0 0
      %363 = vmatpush1.bf16.msra.mxu0 0
      %364 = vmatprep.subr.bf16.mxu0 0
      %365 = vmatpush1.bf16.msra.mxu0 0
      %366 = vmatprep.subr.bf16.mxu0 0
      %367 = vmatpush1.bf16.msra.mxu0 0
      %368 = vmatprep.subr.bf16.mxu0 0
      %369 = vmatpush1.bf16.msra.mxu0 0
      %370 = vmatprep.subr.bf16.mxu0 0
      %371 = vmatpush1.bf16.msra.mxu0 0
      %372 = vmatprep.subr.bf16.mxu0 0
      %373 = vmatpush1.bf16.msra.mxu0 0
      %374 = vmatprep.subr.bf16.mxu0 0
      %375 = vmatpush1.bf16.msra.mxu0 0
      %376 = vmatprep.subr.bf16.mxu0 0
      %377 = vmatpush1.bf16.msra.mxu0 0
      %378 = vmatprep.subr.bf16.mxu0 0
      %379 = vmatpush1.bf16.msra.mxu0 0
      %380 = vmatprep.subr.bf16.mxu0 0
      %381 = vmatpush1.bf16.msra.mxu0 0
      %382 = vmatprep.subr.bf16.mxu0 0
      %383 = vmatpush1.bf16.msra.mxu0 0
      %384 = vmatprep.subr.bf16.mxu0 0
      %385 = vmatpush1.bf16.msra.mxu0 0
      %386 = vmatprep.subr.bf16.mxu0 0
      %387 = vmatpush1.bf16.msra.mxu0 0
      %388 = vmatprep.subr.bf16.mxu0 0
      %389 = vmatpush1.bf16.msra.mxu0 0
      %390 = vmatprep.mubr.bf16.mxu0 0
      %391 = vmatmul.mubr.bf16.gmra.mrb[0].mxu0 %v337
      %v392 = vpop.f32.mrb[0].mxu0
      %v393 = vadd.f32 0.0, %v392
      %v394 = vpop.f32.mrb[0].mxu0
      %v395 = vpop.f32.mrb[0].mxu0
      %v396 = vadd.f32 0.0, %v395
      %v397 = vpop.f32.mrb[0].mxu0
      %398 = vmatprep.mubr.bf16.mxu0 0
      %399 = vmatmul.mubr.bf16.gmra.mrb[0].mxu0 %v340
      %v400 = vpop.f32.mrb[0].mxu0
      %v401 = vadd.f32 0.0, %v400
      %v402 = vpop.f32.mrb[0].mxu0
      %v403 = vpop.f32.mrb[0].mxu0
      %v404 = vadd.f32 0.0, %v403
      %v405 = vpop.f32.mrb[0].mxu0
      %406 = vmatprep.mubr.bf16.mxu0 0
      %407 = vmatmul.mubr.bf16.gmra.mrb[0].mxu0 %v343
      %v408 = vpop.f32.mrb[0].mxu0
      %v409 = vadd.f32 0.0, %v408
      %v410 = vpop.f32.mrb[0].mxu0
      %v411 = vpop.f32.mrb[0].mxu0
      %v412 = vadd.f32 0.0, %v411
      %v413 = vpop.f32.mrb[0].mxu0
      %414 = vmatprep.mubr.bf16.mxu0 0
      %415 = vmatmul.mubr.bf16.gmra.mrb[0].mxu0 %v346
      %v416 = vpop.f32.mrb[0].mxu0
      %v417 = vadd.f32 0.0, %v416
      %v418 = vpop.f32.mrb[0].mxu0
      %v419 = vpop.f32.mrb[0].mxu0
      %v420 = vadd.f32 0.0, %v419
      %v421 = vpop.f32.mrb[0].mxu0
      %422 = vmatprep.mubr.bf16.mxu0 0
      %423 = vmatmul.mubr.bf16.gmra.mrb[0].mxu0 %v349
      %v424 = vpop.f32.mrb[0].mxu0
      %v425 = vadd.f32 0.0, %v424
      %v426 = vpop.f32.mrb[0].mxu0
      %v427 = vpop.f32.mrb[0].mxu0
      %v428 = vadd.f32 0.0, %v427
      %v429 = vpop.f32.mrb[0].mxu0
      %430 = vmatprep.mubr.bf16.mxu0 0
      %431 = vmatmul.mubr.bf16.gmra.mrb[0].mxu0 %v352
      %v432 = vpop.f32.mrb[0].mxu0
      %v433 = vadd.f32 0.0, %v432
      %v434 = vpop.f32.mrb[0].mxu0
      %v435 = vpop.f32.mrb[0].mxu0
      %v436 = vpop.f32.mrb[0].mxu0
      %437 = vdwg.mxu0
      %v438 = vsel %vm335, %v282, 0
      %v440 = vsel %vm335, %v283, 0
      %v442 = vsel %vm335, %v284, 0
      %v444 = vsel %vm335, %v285, 0
      %v446 = vsel %vm335, %v286, 0
      %v448 = vsel %vm335, %v287, 0
      %v451 = vsel %vm354, %v257, 0
      %453 = vmatprep.subr.bf16.mxu0 0
      %454 = vmatpush1.bf16.msra.mxu0 %v451
      %455 = vmatprep.subr.bf16.mxu0 0
      %456 = vmatpush1.bf16.msra.mxu0 0
      %457 = vmatprep.subr.bf16.mxu0 0
      %458 = vmatpush1.bf16.msra.mxu0 0
      %459 = vmatprep.subr.bf16.mxu0 0
      %460 = vmatpush1.bf16.msra.mxu0 0
      %461 = vmatprep.subr.bf16.mxu0 0
      %462 = vmatpush1.bf16.msra.mxu0 0
      %463 = vmatprep.subr.bf16.mxu0 0
      %464 = vmatpush1.bf16.msra.mxu0 0
      %465 = vmatprep.subr.bf16.mxu0 0
      %466 = vmatpush1.bf16.msra.mxu0 0
      %467 = vmatprep.subr.bf16.mxu0 0
      %468 = vmatpush1.bf16.msra.mxu0 0
      %469 = vmatprep.subr.bf16.mxu0 0
      %470 = vmatpush1.bf16.msra.mxu0 0
      %471 = vmatprep.subr.bf16.mxu0 0
      %472 = vmatpush1.bf16.msra.mxu0 0
      %473 = vmatprep.subr.bf16.mxu0 0
      %474 = vmatpush1.bf16.msra.mxu0 0
      %475 = vmatprep.subr.bf16.mxu0 0
      %476 = vmatpush1.bf16.msra.mxu0 0
      %477 = vmatprep.subr.bf16.mxu0 0
      %478 = vmatpush1.bf16.msra.mxu0 0
      %479 = vmatprep.subr.bf16.mxu0 0
      %480 = vmatpush1.bf16.msra.mxu0 0
      %481 = vmatprep.subr.bf16.mxu0 0
      %482 = vmatpush1.bf16.msra.mxu0 0
      %483 = vmatprep.subr.bf16.mxu0 0
      %484 = vmatpush1.bf16.msra.mxu0 0
      %485 = vmatprep.mubr.bf16.mxu0 0
      %486 = vmatmul.mubr.bf16.gmra.mrb[0].mxu0 %v438
      %v487 = vpop.f32.mrb[0].mxu0
      %v488 = vadd.f32 %v393, %v487
      %v489 = vpop.f32.mrb[0].mxu0
      %v490 = vpop.f32.mrb[0].mxu0
      %v491 = vadd.f32 %v396, %v490
      %v492 = vpop.f32.mrb[0].mxu0
      %493 = vmatprep.mubr.bf16.mxu0 0
      %494 = vmatmul.mubr.bf16.gmra.mrb[0].mxu0 %v440
      %v495 = vpop.f32.mrb[0].mxu0
      %v496 = vadd.f32 %v401, %v495
      %v497 = vpop.f32.mrb[0].mxu0
      %v498 = vpop.f32.mrb[0].mxu0
      %v499 = vadd.f32 %v404, %v498
      %v500 = vpop.f32.mrb[0].mxu0
      %501 = vmatprep.mubr.bf16.mxu0 0
      %502 = vmatmul.mubr.bf16.gmra.mrb[0].mxu0 %v442
      %v503 = vpop.f32.mrb[0].mxu0
      %v504 = vadd.f32 %v409, %v503
      %v505 = vpop.f32.mrb[0].mxu0
      %v506 = vpop.f32.mrb[0].mxu0
      %v507 = vadd.f32 %v412, %v506
      %v508 = vpop.f32.mrb[0].mxu0
      %509 = vmatprep.mubr.bf16.mxu0 0
      %510 = vmatmul.mubr.bf16.gmra.mrb[0].mxu0 %v444
      %v511 = vpop.f32.mrb[0].mxu0
      %v512 = vadd.f32 %v417, %v511
      %v513 = vpop.f32.mrb[0].mxu0
      %v514 = vpop.f32.mrb[0].mxu0
      %v515 = vadd.f32 %v420, %v514
      %v516 = vpop.f32.mrb[0].mxu0
      %517 = vmatprep.mubr.bf16.mxu0 0
      %518 = vmatmul.mubr.bf16.gmra.mrb[0].mxu0 %v446
      %v519 = vpop.f32.mrb[0].mxu0
      %v520 = vadd.f32 %v425, %v519
      %v521 = vpop.f32.mrb[0].mxu0
      %v522 = vpop.f32.mrb[0].mxu0
      %v523 = vadd.f32 %v428, %v522
      %v524 = vpop.f32.mrb[0].mxu0
      %525 = vmatprep.mubr.bf16.mxu0 0
      %526 = vmatmul.mubr.bf16.gmra.mrb[0].mxu0 %v448
      %v527 = vpop.f32.mrb[0].mxu0
      %v528 = vadd.f32 %v433, %v527
      %v529 = vpop.f32.mrb[0].mxu0
      %v530 = vpop.f32.mrb[0].mxu0
      %v531 = vpop.f32.mrb[0].mxu0
      %532 = vdwg.mxu0
      %v533 = vld [vmem:[%s239] sm:$0xf]
      %v534 = vld [vmem:[%s239 + $0x4] sm:$0xf]
      %v535 = vld [vmem:[%s239 + $0x8] sm:$0xf]
      %v536 = vld [vmem:[%s239 + $0xc] sm:$0xf]
      %v537 = vld [vmem:[%s239 + $0x10] sm:$0xf]
      %v538 = vld [vmem:[%s239 + $0x14] sm:$0xf]
      %v539 = vld [vmem:[%s239 + $0x18] sm:$0xf]
      %v540 = vld [vmem:[%s239 + $0x1c] sm:$0xf]
      %v541 = vld [vmem:[%s239 + $0x20] sm:$0xf]
      %v542 = vld [vmem:[%s239 + $0x24] sm:$0xf]
      %v543 = vld [vmem:[%s239 + $0x28] sm:$0x1]
      %s544 = scalar_lea.vmem %s2, 8
      %v545 = vld [vmem:[%s544] sm:$0xf]
      %v557 = vunpack.c.l.b16 %v533
      %v558 = vunpack.c.l.b16 %v534
      %v559 = vunpack.c.l.b16 %v535
      %v560 = vunpack.c.l.b16 %v536
      %v561 = vunpack.c.l.b16 %v537
      %v562 = vunpack.c.l.b16 %v538
      %v563 = vunpack.c.l.b16 %v539
      %v564 = vunpack.c.l.b16 %v540
      %v565 = vunpack.c.l.b16 %v541
      %v566 = vunpack.c.l.b16 %v542
      %v567 = vunpack.c.l.b16 %v543
      %v568 = vpack.c.b16 %v558, %v557
      %v569 = vpack.c.b16 %v560, %v559
      %v570 = vpack.c.b16 %v562, %v561
      %v571 = vpack.c.b16 %v564, %v563
      %v572 = vpack.c.b16 %v566, %v565
      %v573 = vpack.c.b16 %v567, %v567
      %v575 = vsel %vm335, %v568, 0
      %v578 = vsel %vm335, %v569, 0
      %v581 = vsel %vm335, %v570, 0
      %v584 = vsel %vm335, %v571, 0
      %v587 = vsel %vm335, %v572, 0
      %v590 = vsel %vm335, %v573, 0
      %v593 = vsel %vm354, %v545, 0
      %595 = vmatprep.subr.bf16.mxu0 0
      %596 = vmatpush1.bf16.msra.mxu0 %v593
      %597 = vmatprep.subr.bf16.mxu0 0
      %598 = vmatpush1.bf16.msra.mxu0 0
      %599 = vmatprep.subr.bf16.mxu0 0
      %600 = vmatpush1.bf16.msra.mxu0 0
      %601 = vmatprep.subr.bf16.mxu0 0
      %602 = vmatpush1.bf16.msra.mxu0 0
      %603 = vmatprep.subr.bf16.mxu0 0
      %604 = vmatpush1.bf16.msra.mxu0 0
      %605 = vmatprep.subr.bf16.mxu0 0
      %606 = vmatpush1.bf16.msra.mxu0 0
      %607 = vmatprep.subr.bf16.mxu0 0
      %608 = vmatpush1.bf16.msra.mxu0 0
      %609 = vmatprep.subr.bf16.mxu0 0
      %610 = vmatpush1.bf16.msra.mxu0 0
      %611 = vmatprep.subr.bf16.mxu0 0
      %612 = vmatpush1.bf16.msra.mxu0 0
      %613 = vmatprep.subr.bf16.mxu0 0
      %614 = vmatpush1.bf16.msra.mxu0 0
      %615 = vmatprep.subr.bf16.mxu0 0
      %616 = vmatpush1.bf16.msra.mxu0 0
      %617 = vmatprep.subr.bf16.mxu0 0
      %618 = vmatpush1.bf16.msra.mxu0 0
      %619 = vmatprep.subr.bf16.mxu0 0
      %620 = vmatpush1.bf16.msra.mxu0 0
      %621 = vmatprep.subr.bf16.mxu0 0
      %622 = vmatpush1.bf16.msra.mxu0 0
      %623 = vmatprep.subr.bf16.mxu0 0
      %624 = vmatpush1.bf16.msra.mxu0 0
      %625 = vmatprep.subr.bf16.mxu0 0
      %626 = vmatpush1.bf16.msra.mxu0 0
      %627 = vmatprep.mubr.bf16.mxu0 0
      %628 = vmatmul.mubr.bf16.gmra.mrb[0].mxu0 %v575
      %v629 = vpop.f32.mrb[0].mxu0
      %v630 = vadd.f32 0.0, %v629
      %v631 = vpop.f32.mrb[0].mxu0
      %v632 = vpop.f32.mrb[0].mxu0
      %v633 = vadd.f32 0.0, %v632
      %v634 = vpop.f32.mrb[0].mxu0
      %635 = vmatprep.mubr.bf16.mxu0 0
      %636 = vmatmul.mubr.bf16.gmra.mrb[0].mxu0 %v578
      %v637 = vpop.f32.mrb[0].mxu0
      %v638 = vadd.f32 0.0, %v637
      %v639 = vpop.f32.mrb[0].mxu0
      %v640 = vpop.f32.mrb[0].mxu0
      %v641 = vadd.f32 0.0, %v640
      %v642 = vpop.f32.mrb[0].mxu0
      %643 = vmatprep.mubr.bf16.mxu0 0
      %644 = vmatmul.mubr.bf16.gmra.mrb[0].mxu0 %v581
      %v645 = vpop.f32.mrb[0].mxu0
      %v646 = vadd.f32 0.0, %v645
      %v647 = vpop.f32.mrb[0].mxu0
      %v648 = vpop.f32.mrb[0].mxu0
      %v649 = vadd.f32 0.0, %v648
      %v650 = vpop.f32.mrb[0].mxu0
      %651 = vmatprep.mubr.bf16.mxu0 0
      %652 = vmatmul.mubr.bf16.gmra.mrb[0].mxu0 %v584
      %v653 = vpop.f32.mrb[0].mxu0
      %v654 = vadd.f32 0.0, %v653
      %v655 = vpop.f32.mrb[0].mxu0
      %v656 = vpop.f32.mrb[0].mxu0
      %v657 = vadd.f32 0.0, %v656
      %v658 = vpop.f32.mrb[0].mxu0
      %659 = vmatprep.mubr.bf16.mxu0 0
      %660 = vmatmul.mubr.bf16.gmra.mrb[0].mxu0 %v587
      %v661 = vpop.f32.mrb[0].mxu0
      %v662 = vadd.f32 0.0, %v661
      %v663 = vpop.f32.mrb[0].mxu0
      %v664 = vpop.f32.mrb[0].mxu0
      %v665 = vadd.f32 0.0, %v664
      %v666 = vpop.f32.mrb[0].mxu0
      %667 = vmatprep.mubr.bf16.mxu0 0
      %668 = vmatmul.mubr.bf16.gmra.mrb[0].mxu0 %v590
      %v669 = vpop.f32.mrb[0].mxu0
      %v670 = vadd.f32 0.0, %v669
      %v671 = vpop.f32.mrb[0].mxu0
      %v672 = vpop.f32.mrb[0].mxu0
      %v673 = vpop.f32.mrb[0].mxu0
      %674 = vdwg.mxu0
      %v675 = vadd.f32 %v488, %v630
      %v676 = vadd.f32 %v491, %v633
      %v677 = vadd.f32 %v496, %v638
      %v678 = vadd.f32 %v499, %v641
      %v679 = vadd.f32 %v504, %v646
      %v680 = vadd.f32 %v507, %v649
      %v681 = vadd.f32 %v512, %v654
      %v682 = vadd.f32 %v515, %v657
      %v683 = vadd.f32 %v520, %v662
      %v684 = vadd.f32 %v523, %v665
      %v685 = vadd.f32 %v528, %v670
      %s686 = scalar_lea.vmem %s2, 12
      %v687 = vld [vmem:[%s686] sm:$0xf]
      %v688 = vshrl.u32 %v568, 16
      %v690 = vshll.u32 %v568, 16
      %v692 = vrot.slane %v690, 1
      %v693 = vor.u32 %v688, %v692
      %v694 = vshll.u32 %v569, 16
      %v696 = vrot.slane %v694, 1
      %v697 = vsel %vm288, %v693, %v696
      %v698 = vshrl.u32 %v569, 16
      %v700 = vor.u32 %v698, %v696
      %v701 = vshll.u32 %v570, 16
      %v703 = vrot.slane %v701, 1
      %v704 = vsel %vm288, %v700, %v703
      %v705 = vshrl.u32 %v570, 16
      %v707 = vor.u32 %v705, %v703
      %v708 = vshll.u32 %v571, 16
      %v710 = vrot.slane %v708, 1
      %v711 = vsel %vm288, %v707, %v710
      %v712 = vshrl.u32 %v571, 16
      %v714 = vor.u32 %v712, %v710
      %v715 = vshll.u32 %v572, 16
      %v717 = vrot.slane %v715, 1
      %v718 = vsel %vm288, %v714, %v717
      %v719 = vshrl.u32 %v572, 16
      %v721 = vor.u32 %v719, %v717
      %v722 = vshll.u32 %v573, 16
      %v724 = vrot.slane %v722, 1
      %v725 = vsel %vm288, %v721, %v724
      %v726 = vshrl.u32 %v573, 16
      %v729 = vsel %vm335, %v697, 0
      %v732 = vsel %vm335, %v704, 0
      %v735 = vsel %vm335, %v711, 0
      %v738 = vsel %vm335, %v718, 0
      %v741 = vsel %vm335, %v725, 0
      %v744 = vsel %vm335, %v726, 0
      %v747 = vsel %vm354, %v687, 0
      %749 = vmatprep.subr.bf16.mxu0 0
      %750 = vmatpush1.bf16.msra.mxu0 %v747
      %751 = vmatprep.subr.bf16.mxu0 0
      %752 = vmatpush1.bf16.msra.mxu0 0
      %753 = vmatprep.subr.bf16.mxu0 0
      %754 = vmatpush1.bf16.msra.mxu0 0
      %755 = vmatprep.subr.bf16.mxu0 0
      %756 = vmatpush1.bf16.msra.mxu0 0
      %757 = vmatprep.subr.bf16.mxu0 0
      %758 = vmatpush1.bf16.msra.mxu0 0
      %759 = vmatprep.subr.bf16.mxu0 0
      %760 = vmatpush1.bf16.msra.mxu0 0
      %761 = vmatprep.subr.bf16.mxu0 0
      %762 = vmatpush1.bf16.msra.mxu0 0
      %763 = vmatprep.subr.bf16.mxu0 0
      %764 = vmatpush1.bf16.msra.mxu0 0
      %765 = vmatprep.subr.bf16.mxu0 0
      %766 = vmatpush1.bf16.msra.mxu0 0
      %767 = vmatprep.subr.bf16.mxu0 0
      %768 = vmatpush1.bf16.msra.mxu0 0
      %769 = vmatprep.subr.bf16.mxu0 0
      %770 = vmatpush1.bf16.msra.mxu0 0
      %771 = vmatprep.subr.bf16.mxu0 0
      %772 = vmatpush1.bf16.msra.mxu0 0
      %773 = vmatprep.subr.bf16.mxu0 0
      %774 = vmatpush1.bf16.msra.mxu0 0
      %775 = vmatprep.subr.bf16.mxu0 0
      %776 = vmatpush1.bf16.msra.mxu0 0
      %777 = vmatprep.subr.bf16.mxu0 0
      %778 = vmatpush1.bf16.msra.mxu0 0
      %779 = vmatprep.subr.bf16.mxu0 0
      %780 = vmatpush1.bf16.msra.mxu0 0
      %781 = vmatprep.mubr.bf16.mxu0 0
      %782 = vmatmul.mubr.bf16.gmra.mrb[0].mxu0 %v729
      %v783 = vpop.f32.mrb[0].mxu0
      %v784 = vadd.f32 0.0, %v783
      %v785 = vpop.f32.mrb[0].mxu0
      %v786 = vpop.f32.mrb[0].mxu0
      %v787 = vadd.f32 0.0, %v786
      %v788 = vpop.f32.mrb[0].mxu0
      %789 = vmatprep.mubr.bf16.mxu0 0
      %790 = vmatmul.mubr.bf16.gmra.mrb[0].mxu0 %v732
      %v791 = vpop.f32.mrb[0].mxu0
      %v792 = vadd.f32 0.0, %v791
      %v793 = vpop.f32.mrb[0].mxu0
      %v794 = vpop.f32.mrb[0].mxu0
      %v795 = vadd.f32 0.0, %v794
      %v796 = vpop.f32.mrb[0].mxu0
      %797 = vmatprep.mubr.bf16.mxu0 0
      %798 = vmatmul.mubr.bf16.gmra.mrb[0].mxu0 %v735
      %v799 = vpop.f32.mrb[0].mxu0
      %v800 = vadd.f32 0.0, %v799
      %v801 = vpop.f32.mrb[0].mxu0
      %v802 = vpop.f32.mrb[0].mxu0
      %v803 = vadd.f32 0.0, %v802
      %v804 = vpop.f32.mrb[0].mxu0
      %805 = vmatprep.mubr.bf16.mxu0 0
      %806 = vmatmul.mubr.bf16.gmra.mrb[0].mxu0 %v738
      %v807 = vpop.f32.mrb[0].mxu0
      %v808 = vadd.f32 0.0, %v807
      %v809 = vpop.f32.mrb[0].mxu0
      %v810 = vpop.f32.mrb[0].mxu0
      %v811 = vadd.f32 0.0, %v810
      %v812 = vpop.f32.mrb[0].mxu0
      %813 = vmatprep.mubr.bf16.mxu0 0
      %814 = vmatmul.mubr.bf16.gmra.mrb[0].mxu0 %v741
      %v815 = vpop.f32.mrb[0].mxu0
      %v816 = vadd.f32 0.0, %v815
      %v817 = vpop.f32.mrb[0].mxu0
      %v818 = vpop.f32.mrb[0].mxu0
      %v819 = vadd.f32 0.0, %v818
      %v820 = vpop.f32.mrb[0].mxu0
      %821 = vmatprep.mubr.bf16.mxu0 0
      %822 = vmatmul.mubr.bf16.gmra.mrb[0].mxu0 %v744
      %v823 = vpop.f32.mrb[0].mxu0
      %v824 = vadd.f32 0.0, %v823
      %v825 = vpop.f32.mrb[0].mxu0
      %v826 = vpop.f32.mrb[0].mxu0
      %v827 = vpop.f32.mrb[0].mxu0
      %828 = vdwg.mxu0
      %v829 = vadd.f32 %v675, %v784
      %v830 = vadd.f32 %v676, %v787
      %v831 = vadd.f32 %v677, %v792
      %v832 = vadd.f32 %v678, %v795
      %v833 = vadd.f32 %v679, %v800
      %v834 = vadd.f32 %v680, %v803
      %v835 = vadd.f32 %v681, %v808
      %v836 = vadd.f32 %v682, %v811
      %v837 = vadd.f32 %v683, %v816
      %v838 = vadd.f32 %v684, %v819
      %v839 = vadd.f32 %v685, %v824
      %v840 = vld [vmem:[%s234 + $0x4] sm:$0xf]
      %v841 = vld [vmem:[%s234 + $0x8] sm:$0xf]
      %v842 = vld [vmem:[%s234 + $0xc] sm:$0xf]
      %v843 = vld [vmem:[%s234 + $0x10] sm:$0xf]
      %v844 = vld [vmem:[%s234 + $0x14] sm:$0xf]
      %v845 = vld [vmem:[%s234 + $0x18] sm:$0xf]
      %v846 = vld [vmem:[%s234 + $0x1c] sm:$0xf]
      %v847 = vld [vmem:[%s234 + $0x20] sm:$0xf]
      %v848 = vld [vmem:[%s234 + $0x24] sm:$0xf]
      %v849 = vld [vmem:[%s234 + $0x28] sm:$0xf]
      %v850 = vld [vmem:[%s234 + $0x2c] sm:$0x1]
      %s851 = scalar_lea.vmem %s2, 16
      %v852 = vld [vmem:[%s851] sm:$0xf]
      %v864 = vunpack.c.l.b16 %v840
      %v865 = vunpack.c.l.b16 %v841
      %v866 = vunpack.c.l.b16 %v842
      %v867 = vunpack.c.l.b16 %v843
      %v868 = vunpack.c.l.b16 %v844
      %v869 = vunpack.c.l.b16 %v845
      %v870 = vunpack.c.l.b16 %v846
      %v871 = vunpack.c.l.b16 %v847
      %v872 = vunpack.c.l.b16 %v848
      %v873 = vunpack.c.l.b16 %v849
      %v874 = vunpack.c.l.b16 %v850
      %v875 = vpack.c.b16 %v865, %v864
      %v876 = vpack.c.b16 %v867, %v866
      %v877 = vpack.c.b16 %v869, %v868
      %v878 = vpack.c.b16 %v871, %v870
      %v879 = vpack.c.b16 %v873, %v872
      %v880 = vpack.c.b16 %v874, %v874
      %v882 = vshrl.u32 %v875, 16
      %v884 = vshll.u32 %v875, 16
      %v886 = vrot.slane %v884, 1
      %v887 = vor.u32 %v882, %v886
      %v889 = vshll.u32 %v876, 16
      %v891 = vrot.slane %v889, 1
      %v892 = vsel %vm288, %v887, %v891
      %v893 = vshrl.u32 %v876, 16
      %v895 = vor.u32 %v893, %v891
      %v897 = vshll.u32 %v877, 16
      %v899 = vrot.slane %v897, 1
      %v900 = vsel %vm288, %v895, %v899
      %v901 = vshrl.u32 %v877, 16
      %v903 = vor.u32 %v901, %v899
      %v905 = vshll.u32 %v878, 16
      %v907 = vrot.slane %v905, 1
      %v908 = vsel %vm288, %v903, %v907
      %v909 = vshrl.u32 %v878, 16
      %v911 = vor.u32 %v909, %v907
      %v913 = vshll.u32 %v879, 16
      %v915 = vrot.slane %v913, 1
      %v916 = vsel %vm288, %v911, %v915
      %v917 = vshrl.u32 %v879, 16
      %v919 = vor.u32 %v917, %v915
      %v921 = vshll.u32 %v880, 16
      %v923 = vrot.slane %v921, 1
      %v924 = vsel %vm288, %v919, %v923
      %v925 = vshrl.u32 %v880, 16
      %v928 = vsel %vm335, %v892, 0
      %v931 = vsel %vm335, %v900, 0
      %v934 = vsel %vm335, %v908, 0
      %v937 = vsel %vm335, %v916, 0
      %v940 = vsel %vm335, %v924, 0
      %v943 = vsel %vm335, %v925, 0
      %v946 = vsel %vm354, %v852, 0
      %948 = vmatprep.subr.bf16.mxu0 0
      %949 = vmatpush1.bf16.msra.mxu0 %v946
      %950 = vmatprep.subr.bf16.mxu0 0
      %951 = vmatpush1.bf16.msra.mxu0 0
      %952 = vmatprep.subr.bf16.mxu0 0
      %953 = vmatpush1.bf16.msra.mxu0 0
      %954 = vmatprep.subr.bf16.mxu0 0
      %955 = vmatpush1.bf16.msra.mxu0 0
      %956 = vmatprep.subr.bf16.mxu0 0
      %957 = vmatpush1.bf16.msra.mxu0 0
      %958 = vmatprep.subr.bf16.mxu0 0
      %959 = vmatpush1.bf16.msra.mxu0 0
      %960 = vmatprep.subr.bf16.mxu0 0
      %961 = vmatpush1.bf16.msra.mxu0 0
      %962 = vmatprep.subr.bf16.mxu0 0
      %963 = vmatpush1.bf16.msra.mxu0 0
      %964 = vmatprep.subr.bf16.mxu0 0
      %965 = vmatpush1.bf16.msra.mxu0 0
      %966 = vmatprep.subr.bf16.mxu0 0
      %967 = vmatpush1.bf16.msra.mxu0 0
      %968 = vmatprep.subr.bf16.mxu0 0
      %969 = vmatpush1.bf16.msra.mxu0 0
      %970 = vmatprep.subr.bf16.mxu0 0
      %971 = vmatpush1.bf16.msra.mxu0 0
      %972 = vmatprep.subr.bf16.mxu0 0
      %973 = vmatpush1.bf16.msra.mxu0 0
      %974 = vmatprep.subr.bf16.mxu0 0
      %975 = vmatpush1.bf16.msra.mxu0 0
      %976 = vmatprep.subr.bf16.mxu0 0
      %977 = vmatpush1.bf16.msra.mxu0 0
      %978 = vmatprep.subr.bf16.mxu0 0
      %979 = vmatpush1.bf16.msra.mxu0 0
      %980 = vmatprep.mubr.bf16.mxu0 0
      %981 = vmatmul.mubr.bf16.gmra.mrb[0].mxu0 %v928
      %v982 = vpop.f32.mrb[0].mxu0
      %v983 = vadd.f32 0.0, %v982
      %v984 = vpop.f32.mrb[0].mxu0
      %v985 = vpop.f32.mrb[0].mxu0
      %v986 = vadd.f32 0.0, %v985
      %v987 = vpop.f32.mrb[0].mxu0
      %988 = vmatprep.mubr.bf16.mxu0 0
      %989 = vmatmul.mubr.bf16.gmra.mrb[0].mxu0 %v931
      %v990 = vpop.f32.mrb[0].mxu0
      %v991 = vadd.f32 0.0, %v990
      %v992 = vpop.f32.mrb[0].mxu0
      %v993 = vpop.f32.mrb[0].mxu0
      %v994 = vadd.f32 0.0, %v993
      %v995 = vpop.f32.mrb[0].mxu0
      %996 = vmatprep.mubr.bf16.mxu0 0
      %997 = vmatmul.mubr.bf16.gmra.mrb[0].mxu0 %v934
      %v998 = vpop.f32.mrb[0].mxu0
      %v999 = vadd.f32 0.0, %v998
      %v1000 = vpop.f32.mrb[0].mxu0
      %v1001 = vpop.f32.mrb[0].mxu0
      %v1002 = vadd.f32 0.0, %v1001
      %v1003 = vpop.f32.mrb[0].mxu0
      %1004 = vmatprep.mubr.bf16.mxu0 0
      %1005 = vmatmul.mubr.bf16.gmra.mrb[0].mxu0 %v937
      %v1006 = vpop.f32.mrb[0].mxu0
      %v1007 = vadd.f32 0.0, %v1006
      %v1008 = vpop.f32.mrb[0].mxu0
      %v1009 = vpop.f32.mrb[0].mxu0
      %v1010 = vadd.f32 0.0, %v1009
      %v1011 = vpop.f32.mrb[0].mxu0
      %1012 = vmatprep.mubr.bf16.mxu0 0
      %1013 = vmatmul.mubr.bf16.gmra.mrb[0].mxu0 %v940
      %v1014 = vpop.f32.mrb[0].mxu0
      %v1015 = vadd.f32 0.0, %v1014
      %v1016 = vpop.f32.mrb[0].mxu0
      %v1017 = vpop.f32.mrb[0].mxu0
      %v1018 = vadd.f32 0.0, %v1017
      %v1019 = vpop.f32.mrb[0].mxu0
      %1020 = vmatprep.mubr.bf16.mxu0 0
      %1021 = vmatmul.mubr.bf16.gmra.mrb[0].mxu0 %v943
      %v1022 = vpop.f32.mrb[0].mxu0
      %v1023 = vadd.f32 0.0, %v1022
      %v1024 = vpop.f32.mrb[0].mxu0
      %v1025 = vpop.f32.mrb[0].mxu0
      %v1026 = vpop.f32.mrb[0].mxu0
      %1027 = vdwg.mxu0
      %v1028 = vadd.f32 %v829, %v983
      %v1029 = vadd.f32 %v830, %v986
      %v1030 = vadd.f32 %v831, %v991
      %v1031 = vadd.f32 %v832, %v994
      %v1032 = vadd.f32 %v833, %v999
      %v1033 = vadd.f32 %v834, %v1002
      %v1034 = vadd.f32 %v835, %v1007
      %v1035 = vadd.f32 %v836, %v1010
      %v1036 = vadd.f32 %v837, %v1015
      %v1037 = vadd.f32 %v838, %v1018
      %v1038 = vadd.f32 %v839, %v1023
      %v1039 = vld [vmem:[%s234 + $0x4] sm:$0xe]
      %v1040 = vld [vmem:[%s234 + $0x2c] sm:$0x3]
      %s1041 = scalar_lea.vmem %s2, 20
      %v1042 = vld [vmem:[%s1041] sm:$0xf]
      %v1045 = vunpack.c.l.b16 %v1039
      %v1046 = vunpack.c.l.b16 %v1040
      %v1047 = vpack.c.b16 %v865, %v1045
      %v1048 = vpack.c.b16 %v1046, %v1046
      %vm1049 = vcmask 1046528
      %v1050 = vrot.slane %v1047, 1
      %v1051 = vrot.slane %v876, 1
      %v1052 = vsel %vm1049, %v1050, %v1051
      %v1053 = vrot.slane %v877, 1
      %v1054 = vsel %vm1049, %v1051, %v1053
      %v1055 = vrot.slane %v878, 1
      %v1056 = vsel %vm1049, %v1053, %v1055
      %v1057 = vrot.slane %v879, 1
      %v1058 = vsel %vm1049, %v1055, %v1057
      %v1059 = vrot.slane %v1048, 1
      %v1060 = vsel %vm1049, %v1057, %v1059
      %v1062 = vsel %vm335, %v1052, 0
      %v1065 = vsel %vm335, %v1054, 0
      %v1068 = vsel %vm335, %v1056, 0
      %v1071 = vsel %vm335, %v1058, 0
      %v1074 = vsel %vm335, %v1060, 0
      %v1077 = vsel %vm335, %v1059, 0
      %v1080 = vsel %vm354, %v1042, 0
      %1082 = vmatprep.subr.bf16.mxu0 0
      %1083 = vmatpush1.bf16.msra.mxu0 %v1080
      %1084 = vmatprep.subr.bf16.mxu0 0
      %1085 = vmatpush1.bf16.msra.mxu0 0
      %1086 = vmatprep.subr.bf16.mxu0 0
      %1087 = vmatpush1.bf16.msra.mxu0 0
      %1088 = vmatprep.subr.bf16.mxu0 0
      %1089 = vmatpush1.bf16.msra.mxu0 0
      %1090 = vmatprep.subr.bf16.mxu0 0
      %1091 = vmatpush1.bf16.msra.mxu0 0
      %1092 = vmatprep.subr.bf16.mxu0 0
      %1093 = vmatpush1.bf16.msra.mxu0 0
      %1094 = vmatprep.subr.bf16.mxu0 0
      %1095 = vmatpush1.bf16.msra.mxu0 0
      %1096 = vmatprep.subr.bf16.mxu0 0
      %1097 = vmatpush1.bf16.msra.mxu0 0
      %1098 = vmatprep.subr.bf16.mxu0 0
      %1099 = vmatpush1.bf16.msra.mxu0 0
      %1100 = vmatprep.subr.bf16.mxu0 0
      %1101 = vmatpush1.bf16.msra.mxu0 0
      %1102 = vmatprep.subr.bf16.mxu0 0
      %1103 = vmatpush1.bf16.msra.mxu0 0
      %1104 = vmatprep.subr.bf16.mxu0 0
      %1105 = vmatpush1.bf16.msra.mxu0 0
      %1106 = vmatprep.subr.bf16.mxu0 0
      %1107 = vmatpush1.bf16.msra.mxu0 0
      %1108 = vmatprep.subr.bf16.mxu0 0
      %1109 = vmatpush1.bf16.msra.mxu0 0
      %1110 = vmatprep.subr.bf16.mxu0 0
      %1111 = vmatpush1.bf16.msra.mxu0 0
      %1112 = vmatprep.subr.bf16.mxu0 0
      %1113 = vmatpush1.bf16.msra.mxu0 0
      %1114 = vmatprep.mubr.bf16.mxu0 0
      %1115 = vmatmul.mubr.bf16.gmra.mrb[0].mxu0 %v1062
      %v1116 = vpop.f32.mrb[0].mxu0
      %v1117 = vadd.f32 0.0, %v1116
      %v1118 = vpop.f32.mrb[0].mxu0
      %v1119 = vpop.f32.mrb[0].mxu0
      %v1120 = vadd.f32 0.0, %v1119
      %v1121 = vpop.f32.mrb[0].mxu0
      %1122 = vmatprep.mubr.bf16.mxu0 0
      %1123 = vmatmul.mubr.bf16.gmra.mrb[0].mxu0 %v1065
      %v1124 = vpop.f32.mrb[0].mxu0
      %v1125 = vadd.f32 0.0, %v1124
      %v1126 = vpop.f32.mrb[0].mxu0
      %v1127 = vpop.f32.mrb[0].mxu0
      %v1128 = vadd.f32 0.0, %v1127
      %v1129 = vpop.f32.mrb[0].mxu0
      %1130 = vmatprep.mubr.bf16.mxu0 0
      %1131 = vmatmul.mubr.bf16.gmra.mrb[0].mxu0 %v1068
      %v1132 = vpop.f32.mrb[0].mxu0
      %v1133 = vadd.f32 0.0, %v1132
      %v1134 = vpop.f32.mrb[0].mxu0
      %v1135 = vpop.f32.mrb[0].mxu0
      %v1136 = vadd.f32 0.0, %v1135
      %v1137 = vpop.f32.mrb[0].mxu0
      %1138 = vmatprep.mubr.bf16.mxu0 0
      %1139 = vmatmul.mubr.bf16.gmra.mrb[0].mxu0 %v1071
      %v1140 = vpop.f32.mrb[0].mxu0
      %v1141 = vadd.f32 0.0, %v1140
      %v1142 = vpop.f32.mrb[0].mxu0
      %v1143 = vpop.f32.mrb[0].mxu0
      %v1144 = vadd.f32 0.0, %v1143
      %v1145 = vpop.f32.mrb[0].mxu0
      %1146 = vmatprep.mubr.bf16.mxu0 0
      %1147 = vmatmul.mubr.bf16.gmra.mrb[0].mxu0 %v1074
      %v1148 = vpop.f32.mrb[0].mxu0
      %v1149 = vadd.f32 0.0, %v1148
      %v1150 = vpop.f32.mrb[0].mxu0
      %v1151 = vpop.f32.mrb[0].mxu0
      %v1152 = vadd.f32 0.0, %v1151
      %v1153 = vpop.f32.mrb[0].mxu0
      %1154 = vmatprep.mubr.bf16.mxu0 0
      %1155 = vmatmul.mubr.bf16.gmra.mrb[0].mxu0 %v1077
      %v1156 = vpop.f32.mrb[0].mxu0
      %v1157 = vadd.f32 0.0, %v1156
      %v1158 = vpop.f32.mrb[0].mxu0
      %v1159 = vpop.f32.mrb[0].mxu0
      %v1160 = vpop.f32.mrb[0].mxu0
      %1161 = vdwg.mxu0
      %v1162 = vadd.f32 %v1028, %v1117
      %v1163 = vadd.f32 %v1029, %v1120
      %v1164 = vadd.f32 %v1030, %v1125
      %v1165 = vadd.f32 %v1031, %v1128
      %v1166 = vadd.f32 %v1032, %v1133
      %v1167 = vadd.f32 %v1033, %v1136
      %v1168 = vadd.f32 %v1034, %v1141
      %v1169 = vadd.f32 %v1035, %v1144
      %v1170 = vadd.f32 %v1036, %v1149
      %v1171 = vadd.f32 %v1037, %v1152
      %v1172 = vadd.f32 %v1038, %v1157
      %1173 = vadd.xlane.f32.xlu0 %v1162
      %v1174 = vpop.xlane.xlu0 %1173
      %1175 = vadd.xlane.f32.xlu0 %v1163
      %v1176 = vpop.xlane.xlu0 %1175
      %1177 = vadd.xlane.f32.xlu0 %v1164
      %v1178 = vpop.xlane.xlu0 %1177
      %1179 = vadd.xlane.f32.xlu0 %v1165
      %v1180 = vpop.xlane.xlu0 %1179
      %1181 = vadd.xlane.f32.xlu0 %v1166
      %v1182 = vpop.xlane.xlu0 %1181
      %1183 = vadd.xlane.f32.xlu0 %v1167
      %v1184 = vpop.xlane.xlu0 %1183
      %1185 = vadd.xlane.f32.xlu0 %v1168
      %v1186 = vpop.xlane.xlu0 %1185
      %1187 = vadd.xlane.f32.xlu0 %v1169
      %v1188 = vpop.xlane.xlu0 %1187
      %1189 = vadd.xlane.f32.xlu0 %v1170
      %v1190 = vpop.xlane.xlu0 %1189
      %1191 = vadd.xlane.f32.xlu0 %v1171
      %v1192 = vpop.xlane.xlu0 %1191
      %vm1193 = vcmask 1040384
      %v1194 = vsel %vm1193, %v1172, 0.0
      %1195 = vadd.xlane.f32.xlu0 %v1194
      %v1196 = vpop.xlane.xlu0 %1195
      %v1197 = vmul.f32 %v1174, 0.125
      %v1198 = vmul.f32 %v1176, 0.125
      %v1199 = vmul.f32 %v1178, 0.125
      %v1200 = vmul.f32 %v1180, 0.125
      %v1201 = vmul.f32 %v1182, 0.125
      %v1202 = vmul.f32 %v1184, 0.125
      %v1203 = vmul.f32 %v1186, 0.125
      %v1204 = vmul.f32 %v1188, 0.125
      %v1205 = vmul.f32 %v1190, 0.125
      %v1206 = vmul.f32 %v1192, 0.125
      %v1207 = vmul.f32 %v1196, 0.125
      %v1208 = vmul.f32 %v1162, %v1162
      %v1209 = vmul.f32 %v1163, %v1163
      %v1210 = vmul.f32 %v1164, %v1164
      %v1211 = vmul.f32 %v1165, %v1165
      %v1212 = vmul.f32 %v1166, %v1166
      %v1213 = vmul.f32 %v1167, %v1167
      %v1214 = vmul.f32 %v1168, %v1168
      %v1215 = vmul.f32 %v1169, %v1169
      %v1216 = vmul.f32 %v1170, %v1170
      %v1217 = vmul.f32 %v1171, %v1171
      %v1218 = vmul.f32 %v1172, %v1172
      %1219 = vadd.xlane.f32.xlu0 %v1208
      %v1220 = vpop.xlane.xlu0 %1219
      %1221 = vadd.xlane.f32.xlu0 %v1209
      %v1222 = vpop.xlane.xlu0 %1221
      %1223 = vadd.xlane.f32.xlu0 %v1210
      %v1224 = vpop.xlane.xlu0 %1223
      %1225 = vadd.xlane.f32.xlu0 %v1211
      %v1226 = vpop.xlane.xlu0 %1225
      %1227 = vadd.xlane.f32.xlu0 %v1212
      %v1228 = vpop.xlane.xlu0 %1227
      %1229 = vadd.xlane.f32.xlu0 %v1213
      %v1230 = vpop.xlane.xlu0 %1229
      %1231 = vadd.xlane.f32.xlu0 %v1214
      %v1232 = vpop.xlane.xlu0 %1231
      %1233 = vadd.xlane.f32.xlu0 %v1215
      %v1234 = vpop.xlane.xlu0 %1233
      %1235 = vadd.xlane.f32.xlu0 %v1216
      %v1236 = vpop.xlane.xlu0 %1235
      %1237 = vadd.xlane.f32.xlu0 %v1217
      %v1238 = vpop.xlane.xlu0 %1237
      %v1239 = vsel %vm1193, %v1218, 0.0
      %1240 = vadd.xlane.f32.xlu0 %v1239
      %v1241 = vpop.xlane.xlu0 %1240
      %v1242 = vmul.f32 %v1220, 0.125
      %v1243 = vmul.f32 %v1222, 0.125
      %v1244 = vmul.f32 %v1224, 0.125
      %v1245 = vmul.f32 %v1226, 0.125
      %v1246 = vmul.f32 %v1228, 0.125
      %v1247 = vmul.f32 %v1230, 0.125
      %v1248 = vmul.f32 %v1232, 0.125
      %v1249 = vmul.f32 %v1234, 0.125
      %v1250 = vmul.f32 %v1236, 0.125
      %v1251 = vmul.f32 %v1238, 0.125
      %v1252 = vmul.f32 %v1241, 0.125
      %v1253 = vmul.f32 %v1197, %v1197
      %v1254 = vmul.f32 %v1198, %v1198
      %v1255 = vmul.f32 %v1199, %v1199
      %v1256 = vmul.f32 %v1200, %v1200
      %v1257 = vmul.f32 %v1201, %v1201
      %v1258 = vmul.f32 %v1202, %v1202
      %v1259 = vmul.f32 %v1203, %v1203
      %v1260 = vmul.f32 %v1204, %v1204
      %v1261 = vmul.f32 %v1205, %v1205
      %v1262 = vmul.f32 %v1206, %v1206
      %v1263 = vmul.f32 %v1207, %v1207
      %v1264 = vsub.f32 %v1242, %v1253
      %v1265 = vsub.f32 %v1243, %v1254
      %v1266 = vsub.f32 %v1244, %v1255
      %v1267 = vsub.f32 %v1245, %v1256
      %v1268 = vsub.f32 %v1246, %v1257
      %v1269 = vsub.f32 %v1247, %v1258
      %v1270 = vsub.f32 %v1248, %v1259
      %v1271 = vsub.f32 %v1249, %v1260
      %v1272 = vsub.f32 %v1250, %v1261
      %v1273 = vsub.f32 %v1251, %v1262
      %v1274 = vsub.f32 %v1252, %v1263
      %v1275 = vmax.f32 %v1264, 0.0
      %v1276 = vmax.f32 %v1265, 0.0
      %v1277 = vmax.f32 %v1266, 0.0
      %v1278 = vmax.f32 %v1267, 0.0
      %v1279 = vmax.f32 %v1268, 0.0
      %v1280 = vmax.f32 %v1269, 0.0
      %v1281 = vmax.f32 %v1270, 0.0
      %v1282 = vmax.f32 %v1271, 0.0
      %v1283 = vmax.f32 %v1272, 0.0
      %v1284 = vmax.f32 %v1273, 0.0
      %v1285 = vmax.f32 %v1274, 0.0
      %v1286 = vadd.f32 %v1275, 1e-05
      %v1287 = vadd.f32 %v1276, 1e-05
      %v1288 = vadd.f32 %v1277, 1e-05
      %v1289 = vadd.f32 %v1278, 1e-05
      %v1290 = vadd.f32 %v1279, 1e-05
      %v1291 = vadd.f32 %v1280, 1e-05
      %v1292 = vadd.f32 %v1281, 1e-05
      %v1293 = vadd.f32 %v1282, 1e-05
      %v1294 = vadd.f32 %v1283, 1e-05
      %v1295 = vadd.f32 %v1284, 1e-05
      %v1296 = vadd.f32 %v1285, 1e-05
      %v1297 = vrsqrt.pop %v1286
      %v1298 = vrsqrt.pop %v1287
      %v1299 = vrsqrt.pop %v1288
      %v1300 = vrsqrt.pop %v1289
      %v1301 = vrsqrt.pop %v1290
      %v1302 = vrsqrt.pop %v1291
      %v1303 = vrsqrt.pop %v1292
      %v1304 = vrsqrt.pop %v1293
      %v1305 = vrsqrt.pop %v1294
      %v1306 = vrsqrt.pop %v1295
      %v1307 = vrsqrt.pop %v1296
      %v1308 = vsub.f32 %v1162, %v1197
      %v1309 = vsub.f32 %v1163, %v1198
      %v1310 = vsub.f32 %v1164, %v1199
      %v1311 = vsub.f32 %v1165, %v1200
      %v1312 = vsub.f32 %v1166, %v1201
      %v1313 = vsub.f32 %v1167, %v1202
      %v1314 = vsub.f32 %v1168, %v1203
      %v1315 = vsub.f32 %v1169, %v1204
      %v1316 = vsub.f32 %v1170, %v1205
      %v1317 = vsub.f32 %v1171, %v1206
      %v1318 = vsub.f32 %v1172, %v1207
      %v1319 = vmul.f32 %v1308, %v1297
      %v1320 = vmul.f32 %v1309, %v1298
      %v1321 = vmul.f32 %v1310, %v1299
      %v1322 = vmul.f32 %v1311, %v1300
      %v1323 = vmul.f32 %v1312, %v1301
      %v1324 = vmul.f32 %v1313, %v1302
      %v1325 = vmul.f32 %v1314, %v1303
      %v1326 = vmul.f32 %v1315, %v1304
      %v1327 = vmul.f32 %v1316, %v1305
      %v1328 = vmul.f32 %v1317, %v1306
      %v1329 = vmul.f32 %v1318, %v1307
      %v1330 = vld [vmem:[%s3] sm:$0x1]
      %v1332 = vlaneseq
      %v1333 = vshrl.u32 %v1332, 7
      %v1334 = vsub.s32 0, %v1333
      %v1335 = vrot.slane %v1330, %v1334
      %v1337 = vmul.f32 %v1319, %v1335
      %v1338 = vmul.f32 %v1320, %v1335
      %v1339 = vmul.f32 %v1321, %v1335
      %v1340 = vmul.f32 %v1322, %v1335
      %v1341 = vmul.f32 %v1323, %v1335
      %v1342 = vmul.f32 %v1324, %v1335
      %v1343 = vmul.f32 %v1325, %v1335
      %v1344 = vmul.f32 %v1326, %v1335
      %v1345 = vmul.f32 %v1327, %v1335
      %v1346 = vmul.f32 %v1328, %v1335
      %v1347 = vmul.f32 %v1329, %v1335
      %v1348 = vld [vmem:[%s4] sm:$0x1]
      %v1350 = vlaneseq
      %v1351 = vshrl.u32 %v1350, 7
      %v1352 = vsub.s32 0, %v1351
      %v1353 = vrot.slane %v1348, %v1352
      %v1355 = vadd.f32 %v1337, %v1353
      %v1356 = vadd.f32 %v1338, %v1353
      %v1357 = vadd.f32 %v1339, %v1353
      %v1358 = vadd.f32 %v1340, %v1353
      %v1359 = vadd.f32 %v1341, %v1353
      %v1360 = vadd.f32 %v1342, %v1353
      %v1361 = vadd.f32 %v1343, %v1353
      %v1362 = vadd.f32 %v1344, %v1353
      %v1363 = vadd.f32 %v1345, %v1353
      %v1364 = vadd.f32 %v1346, %v1353
      %v1365 = vadd.f32 %v1347, %v1353
      %1366 = vst [vmem:[%s244] sm:$0xff] %v1355
      %1367 = vst [vmem:[%s244 + $0x8] sm:$0xff] %v1356
      %1368 = vst [vmem:[%s244 + $0x10] sm:$0xff] %v1357
      %1369 = vst [vmem:[%s244 + $0x18] sm:$0xff] %v1358
      %1370 = vst [vmem:[%s244 + $0x20] sm:$0xff] %v1359
      %1371 = vst [vmem:[%s244 + $0x28] sm:$0xff] %v1360
      %1372 = vst [vmem:[%s244 + $0x30] sm:$0xff] %v1361
      %1373 = vst [vmem:[%s244 + $0x38] sm:$0xff] %v1362
      %1374 = vst [vmem:[%s244 + $0x40] sm:$0xff] %v1363
      %1375 = vst [vmem:[%s244 + $0x48] sm:$0xff] %v1364
      %1376 = vst [vmem:[%s244 + $0x50] sm:$0x1] %v1365
      %p1377 = scmp.lt.s32.totalorder %s16, 1
      %s1378 = scalar_select %p1377, %s16, 1
      %s1379 = smul.addr %s1378, 11
      %s1380 = smul.addr %s1379, 8
      %s1381 = scalar_lea.vmem %s5, %s1380
      // Predicated region
      $region41: #{conv2_downsampler_pallas.1} parent=39 // pred_check
        %p1382 = pneg %p149
      $region42: #{conv2_downsampler_pallas.1} parent=39 // pred_check_branch
        %1384 = sbr.rel (%p1382) target = $region44
      $region43: #{conv2_downsampler_pallas.1} parent=39 // pred_region
        _
      $region44: #{conv2_downsampler_pallas.1} parent=39 // pred_fallthru
        _
    $region40: #{conv2_downsampler_pallas.1} parent=5 // pred_fallthru
      _
    %p1385 = scmp.le.s32.totalorder 2, %s11
    // Predicated region
    $region45: #{conv2_downsampler_pallas.1} parent=5 // pred_check
      %p1386 = pneg %p1385
    $region46: #{conv2_downsampler_pallas.1} parent=5 // pred_check_branch
      %1388 = sbr.rel (%p1386) target = $region48
    $region47: #{conv2_downsampler_pallas.1} parent=5 // pred_region
      %s1389 = ssub.s32 %s11, 2
      // Predicated region
      $region49: #{conv2_downsampler_pallas.1} parent=47 // pred_check
        %p1390 = pneg %p155
      $region50: #{conv2_downsampler_pallas.1} parent=47 // pred_check_branch
        %1392 = sbr.rel (%p1390) target = $region52
      $region51: #{conv2_downsampler_pallas.1} parent=47 // pred_region
        %p1393 = scmp.lt.s32.totalorder %s17, 1
        %s1394 = scalar_select %p1393, %s17, 1
        %s1395 = smul.addr %s1394, 11
        %s1396 = smul.addr %s1395, 8
        %s1397 = scalar_lea.vmem %s5, %s1396
      $region52: #{conv2_downsampler_pallas.1} parent=47 // pred_fallthru
        _
    $region48: #{conv2_downsampler_pallas.1} parent=5 // pred_fallthru
      _
  $region6: #{conv2_downsampler_pallas.1} parent=0 // loop_footer
    %s15 = sadd.s32 1, %s11
  $region7: #{conv2_downsampler_pallas.1} parent=0 // loop_footer_branch
    %10 = sbr.rel target = $region3
  $region8: #{conv2_downsampler_pallas.1} parent=0 // loop_exit
    _

</llo_original>
